<compile_context>
chip_gen: v6e
topology: v6e:2x2x1
jax: 0.10.0
libtpu: 0.0.40
codegen_flags: <defaults>
</compile_context>

<pallas_src>
import jax
import jax.numpy as jnp
from jax.experimental import pallas as pl
from jax.experimental.pallas import tpu as pltpu


def attention_kernel(h_ref, enc_ref, w_ref, bias_ref, out_ref):
    """One B-block of the attention forward pass.

    h_ref    (BB, H)      decoder hidden block
    enc_ref  (BB, C, H)   encoder outputs block
    w_ref    (H, 2H)      [W_1.weight.T | W_2.weight.T]   (grid-resident)
    bias_ref (2, H)       row 0: b1 + b2, row 1: V.weight (grid-resident)
    out_ref  (BB, H + C)  [:, :H] = attention-aware hidden, [:, H:] = attention
    """
    BB, H = h_ref.shape
    C = enc_ref.shape[1]

    h = h_ref[...]                       # (BB, H)     f32
    enc = enc_ref[...]                   # (BB, C, H)  f32
    enc_flat = enc.reshape(BB * C, H)    # f32, C == 8 == sublane tile -> pure view

    # --- Merged projection: a single MXU push computes W_1(h) and W_2(enc). ---
    # enc rows first so both result slices start at sublane-tile-aligned rows.
    x = jnp.concatenate([enc_flat, h], axis=0)                        # (BB*C+BB, H)
    xw = jnp.dot(x, w_ref[...], preferred_element_type=jnp.float32)   # (BB*C+BB, 2H)

    e = xw[: BB * C, H:].reshape(BB, C, H)     # enc @ W_2.weight.T
    d = xw[BB * C:, :H]                        # h   @ W_1.weight.T

    b12 = bias_ref[0:1, :].reshape(1, 1, H)    # b_1 + b_2 (folded once, outside step path)
    v = bias_ref[1:2, :].reshape(1, 1, H)      # V.weight row

    # tanh on the EUP; all post-matmul elementwise math stays f32.
    t = jnp.tanh(d[:, None, :] + e + b12)                              # (BB, C, H)

    # V(.) contracts H (lane axis).  V.bias is a uniform shift of the logits and
    # cancels exactly under softmax, so it is omitted (no approximation).
    scores = jnp.sum(t * v, axis=-1)                                   # (BB, C)
    m = jnp.max(scores, axis=-1, keepdims=True)
    p = jnp.exp(scores - m)
    attn = p / jnp.sum(p, axis=-1, keepdims=True)                      # (BB, C)

    # Attention-aware hidden state: VPU multiply + sublane (C) reduce.
    aware = jnp.sum(enc * attn[:, :, None], axis=1)                    # (BB, H)

    # Single packed output slab (one output DMA stream, B on sublanes).
    out_ref[:, :H] = aware.astype(out_ref.dtype)
    out_ref[:, H:] = attn.astype(out_ref.dtype)


def prepare_params(params):
    """One-time parameter packing (call once, OUTSIDE the per-step path).

    w_packed    (H, 2H) = [W_1.weight.T | W_2.weight.T]
    bias_packed (2, H)  = [b_1 + b_2 ; V.weight row]
    V.bias is dropped: softmax is shift-invariant, so it cancels exactly.
    """
    w_packed = jnp.concatenate([params["w1"], params["w2"]], axis=1).astype(jnp.float32)
    bias_packed = jnp.concatenate(
        [params["b1"] + params["b2"], params["v"]], axis=0).astype(jnp.float32)
    return {"w": w_packed, "bias": bias_packed}


def _pick_block_b(B):
    # Largest convenient B-block (bigger blocks amortize the ~0.35us/step cost);
    # a single full block is fine for small or ragged B at H=32, C=8.
    for cand in (512, 256, 128, 64, 32, 16, 8):
        if B % cand == 0:
            return cand
    return B


@jax.jit
def attention_forward(decoder_hidden, encoder_outputs, packed_params):
    """Mirrors Attention.forward.

    decoder_hidden:  (B, H) f32
    encoder_outputs: (B, C, H) f32
    packed_params:   output of prepare_params(params)
    returns: (attention_aware_hidden_state (B, H), attention (B, C))
    """
    B, C, H = encoder_outputs.shape
    bb = _pick_block_b(B)
    nb = pl.cdiv(B, bb)

    out = pl.pallas_call(
        attention_kernel,
        out_shape=jax.ShapeDtypeStruct((B, H + C), jnp.float32),
        grid_spec=pltpu.PrefetchScalarGridSpec(
            num_scalar_prefetch=0,
            grid=(nb,),
            in_specs=[
                pl.BlockSpec((bb, H), lambda i: (i, 0)),         # decoder hidden block
                pl.BlockSpec((bb, C, H), lambda i: (i, 0, 0)),   # encoder outputs block
                pl.BlockSpec((H, 2 * H), lambda i: (0, 0)),      # packed weights, resident
                pl.BlockSpec((2, H), lambda i: (0, 0)),          # packed biases, resident
            ],
            out_specs=pl.BlockSpec((bb, H + C), lambda i: (i, 0)),
        ),
        compiler_params=pltpu.CompilerParams(
            dimension_semantics=("parallel",),   # B-blocks are independent (v7x: 2 TCs)
        ),
    )(decoder_hidden, encoder_outputs, packed_params["w"], packed_params["bias"])

    aware = out[:, :H]
    attn = out[:, H:]
    return aware, attn


def reference_forward(decoder_hidden, encoder_outputs, params):
    """Pure-JAX reference, same math as the PyTorch module (includes V.bias)."""
    D = decoder_hidden @ params["w1"] + params["b1"]
    E = jnp.einsum("bch,hk->bck", encoder_outputs, params["w2"]) + params["b2"]
    t = jnp.tanh(D[:, None, :] + E)
    scores = jnp.sum(t * params["v"][None, :, :], axis=-1) + params["bv"]
    attn = jax.nn.softmax(scores, axis=-1)
    aware = jnp.sum(encoder_outputs * attn[:, :, None], axis=1)
    return aware, attn


def make_params(key, hidden_size):
    H = hidden_size
    ks = jax.random.split(key, 6)
    s = 0.1
    return {
        "w1": s * jax.random.normal(ks[0], (H, H), jnp.float32),   # W_1.weight.T
        "b1": s * jax.random.normal(ks[1], (1, H), jnp.float32),
        "w2": s * jax.random.normal(ks[2], (H, H), jnp.float32),   # W_2.weight.T
        "b2": s * jax.random.normal(ks[3], (1, H), jnp.float32),
        "v":  s * jax.random.normal(ks[4], (1, H), jnp.float32),   # V.weight (row)
        "bv": s * jax.random.normal(ks[5], (1, 1), jnp.float32),   # V.bias
    }


if __name__ == "__main__":
    key = jax.random.PRNGKey(0)
    k_h, k_enc, k_par, k_h2, k_enc2 = jax.random.split(key, 5)

    H, C = 32, 8
    params = make_params(k_par, H)
    packed = prepare_params(params)   # one-time packing, outside the step path

    # Small shapes from the module spec.
    B = 2
    decoder_hidden = jax.random.normal(k_h, (B, H), jnp.float32)
    encoder_outputs = jax.random.normal(k_enc, (B, C, H), jnp.float32)

    aware, attn = attention_forward(decoder_hidden, encoder_outputs, packed)
    jax.block_until_ready((aware, attn))

    aware_ref, attn_ref = reference_forward(decoder_hidden, encoder_outputs, params)
    assert jnp.allclose(aware, aware_ref, atol=1e-5, rtol=1e-5)
    assert jnp.allclose(attn, attn_ref, atol=1e-5, rtol=1e-5)

    # Larger batch: exercises the multi-block "parallel" grid and the
    # VMEM-resident packed weights across grid steps.
    B2 = 1024
    dh2 = jax.random.normal(k_h2, (B2, H), jnp.float32)
    eo2 = jax.random.normal(k_enc2, (B2, C, H), jnp.float32)
    aware2, attn2 = attention_forward(dh2, eo2, packed)
    jax.block_until_ready((aware2, attn2))

    aware2_ref, attn2_ref = reference_forward(dh2, eo2, params)
    assert jnp.allclose(aware2, aware2_ref, atol=1e-5, rtol=1e-5)
    assert jnp.allclose(attn2, attn2_ref, atol=1e-5, rtol=1e-5)

    print("KERNEL_OK")
</pallas_src>

<mosaic_0001>
module attributes {stable_mosaic.version = 11 : i64} {
  func.func @attention_kernel(%arg0: i32, %arg1: memref<2x32xf32, #tpu.memory_space<vmem>>, %arg2: memref<2x8x32xf32, #tpu.memory_space<vmem>>, %arg3: memref<32x64xf32, #tpu.memory_space<vmem>>, %arg4: memref<2x32xf32, #tpu.memory_space<vmem>>, %arg5: memref<2x40xf32, #tpu.memory_space<vmem>>) attributes {dimension_semantics = [#tpu.dimension_semantics<parallel>], iteration_bounds = array<i64: 1>, scalar_prefetch = 0 : i64, scratch_operands = 0 : i64, tpu.core_type = #tpu.core_type<tc>, window_params = [{transform_indices = @transform_0, window_bounds = array<i64: 2, 32>}, {transform_indices = @transform_1, window_bounds = array<i64: 2, 8, 32>}, {pipeline_mode = #tpu.pipeline_mode<synchronous>, transform_indices = @transform_2, window_bounds = array<i64: 32, 64>}, {pipeline_mode = #tpu.pipeline_mode<synchronous>, transform_indices = @transform_3, window_bounds = array<i64: 2, 32>}, {transform_indices = @transform_4, window_bounds = array<i64: 2, 40>}]} {
    %c0 = arith.constant 0 : index
    %c0_0 = arith.constant 0 : index
    %0 = vector.load %arg1[%c0, %c0_0] : memref<2x32xf32, #tpu.memory_space<vmem>>, vector<2x32xf32>
    %c0_1 = arith.constant 0 : index
    %c0_2 = arith.constant 0 : index
    %c0_3 = arith.constant 0 : index
    %1 = vector.load %arg2[%c0_1, %c0_2, %c0_3] : memref<2x8x32xf32, #tpu.memory_space<vmem>>, vector<2x8x32xf32>
    %2 = vector.shape_cast %1 : vector<2x8x32xf32> to vector<16x32xf32>
    %3 = tpu.concatenate %2, %0 in 0 : vector<16x32xf32>, vector<2x32xf32> -> vector<18x32xf32>
    %c0_4 = arith.constant 0 : index
    %c0_5 = arith.constant 0 : index
    %4 = vector.load %arg3[%c0_4, %c0_5] : memref<32x64xf32, #tpu.memory_space<vmem>>, vector<32x64xf32>
    %cst = arith.constant dense<0.000000e+00> : vector<18x64xf32>
    %5 = tpu.matmul %3, %4, %cst {dimension_numbers = #tpu.dot_dimension_numbers<[1], [0], [0], [1], [0, 0, 1, 1], [], []>} : vector<18x32xf32>, vector<32x64xf32>, vector<18x64xf32> -> vector<18x64xf32>
    %6 = vector.extract_strided_slice %5 {offsets = [0, 32], sizes = [16, 32], strides = [1, 1]} : vector<18x64xf32> to vector<16x32xf32>
    %7 = vector.shape_cast %6 : vector<16x32xf32> to vector<2x8x32xf32>
    %8 = vector.extract_strided_slice %5 {offsets = [16, 0], sizes = [2, 32], strides = [1, 1]} : vector<18x64xf32> to vector<2x32xf32>
    %c0_6 = arith.constant 0 : index
    %c0_7 = arith.constant 0 : index
    %9 = vector.load %arg4[%c0_6, %c0_7] : memref<2x32xf32, #tpu.memory_space<vmem>>, vector<1x32xf32>
    %10 = vector.shape_cast %9 : vector<1x32xf32> to vector<1x1x32xf32>
    %c1 = arith.constant 1 : index
    %c0_8 = arith.constant 0 : index
    %11 = vector.load %arg4[%c1, %c0_8] : memref<2x32xf32, #tpu.memory_space<vmem>>, vector<1x32xf32>
    %12 = vector.shape_cast %11 : vector<1x32xf32> to vector<1x1x32xf32>
    %13 = vector.shape_cast %8 : vector<2x32xf32> to vector<2x1x32xf32>
    %14 = vector.broadcast %13 : vector<2x1x32xf32> to vector<2x8x32xf32>
    %15 = arith.addf %14, %7 : vector<2x8x32xf32>
    %16 = vector.broadcast %10 : vector<1x1x32xf32> to vector<2x8x32xf32>
    %17 = arith.addf %15, %16 : vector<2x8x32xf32>
    %18 = math.tanh %17 : vector<2x8x32xf32>
    %19 = vector.broadcast %12 : vector<1x1x32xf32> to vector<2x8x32xf32>
    %20 = arith.mulf %18, %19 : vector<2x8x32xf32>
    %cst_9 = arith.constant dense<0.000000e+00> : vector<2x8xf32>
    %21 = vector.multi_reduction <add>, %20, %cst_9 [2] : vector<2x8x32xf32> to vector<2x8xf32>
    %cst_10 = arith.constant dense<0xFF800000> : vector<2xf32>
    %22 = vector.multi_reduction <maximumf>, %21, %cst_10 [1] : vector<2x8xf32> to vector<2xf32>
    %23 = vector.shape_cast %22 : vector<2xf32> to vector<2x1xf32>
    %24 = vector.broadcast %23 : vector<2x1xf32> to vector<2x8xf32>
    %25 = arith.subf %21, %24 : vector<2x8xf32>
    %26 = math.exp %25 : vector<2x8xf32>
    %cst_11 = arith.constant dense<0.000000e+00> : vector<2xf32>
    %27 = vector.multi_reduction <add>, %26, %cst_11 [1] : vector<2x8xf32> to vector<2xf32>
    %28 = vector.shape_cast %27 : vector<2xf32> to vector<2x1xf32>
    %29 = vector.broadcast %28 : vector<2x1xf32> to vector<2x8xf32>
    %30 = arith.divf %26, %29 : vector<2x8xf32>
    %31 = vector.shape_cast %30 : vector<2x8xf32> to vector<2x8x1xf32>
    %32 = vector.broadcast %31 : vector<2x8x1xf32> to vector<2x8x32xf32>
    %33 = arith.mulf %1, %32 : vector<2x8x32xf32>
    %cst_12 = arith.constant dense<0.000000e+00> : vector<2x32xf32>
    %34 = vector.multi_reduction <add>, %33, %cst_12 [1] : vector<2x8x32xf32> to vector<2x32xf32>
    %c0_13 = arith.constant 0 : index
    %c0_14 = arith.constant 0 : index
    %35 = vector.load %arg5[%c0_13, %c0_14] : memref<2x40xf32, #tpu.memory_space<vmem>>, vector<2x32xf32>
    tpu.vector_store %arg5[%c0_13, %c0_14], %34 {strides = array<i32>} : memref<2x40xf32, #tpu.memory_space<vmem>>, vector<2x32xf32>,
    %c0_15 = arith.constant 0 : index
    %c32 = arith.constant 32 : index
    %36 = vector.load %arg5[%c0_15, %c32] : memref<2x40xf32, #tpu.memory_space<vmem>>, vector<2x8xf32>
    tpu.vector_store %arg5[%c0_15, %c32], %30 {strides = array<i32>} : memref<2x40xf32, #tpu.memory_space<vmem>>, vector<2x8xf32>,
    return
  }
  func.func @transform_0(%arg0: i32) -> (i32, i32) {
    %c0_i32 = arith.constant 0 : i32
    %c0_i32_0 = arith.constant 0 : i32
    return %arg0, %c0_i32 : i32, i32
  }
  func.func @transform_1(%arg0: i32) -> (i32, i32, i32) {
    %c0_i32 = arith.constant 0 : i32
    %c0_i32_0 = arith.constant 0 : i32
    %c0_i32_1 = arith.constant 0 : i32
    return %arg0, %c0_i32, %c0_i32_0 : i32, i32, i32
  }
  func.func @transform_2(%arg0: i32) -> (i32, i32) {
    %c0_i32 = arith.constant 0 : i32
    %c0_i32_0 = arith.constant 0 : i32
    %c0_i32_1 = arith.constant 0 : i32
    return %c0_i32, %c0_i32_0 : i32, i32
  }
  func.func @transform_3(%arg0: i32) -> (i32, i32) {
    %c0_i32 = arith.constant 0 : i32
    %c0_i32_0 = arith.constant 0 : i32
    %c0_i32_1 = arith.constant 0 : i32
    return %c0_i32, %c0_i32_0 : i32, i32
  }
  func.func @transform_4(%arg0: i32) -> (i32, i32) {
    %c0_i32 = arith.constant 0 : i32
    %c0_i32_0 = arith.constant 0 : i32
    return %arg0, %c0_i32 : i32, i32
  }
}

</mosaic_0001>

<llo_original>
// kernel: attention_forward.1
$region0: #{attention_forward.1}
  #allocation0 [shape = 'u32[]', space=smem, size = 0x4, offset = 0x4, fixed_abs, tag = 'smem constant byte address 0x4 - core index']
  #allocation1 [shape = 'u32[144,128]{1,0:T(1,128)}', space=vmem, size = 0x12000, scoped, tag = 'internal scratch']
  %s0 = inlined_call_operand.hbm [shape: f32[2,32], index: 0, kind: input, shape index: {}]
  %s1 = inlined_call_operand.hbm [shape: f32[2,8,32], index: 1, kind: input, shape index: {}]
  %s2 = inlined_call_operand.hbm [shape: f32[32,64], index: 2, kind: input, shape index: {}]
  %s3 = inlined_call_operand.vmem [shape: f32[2,32], index: 3, kind: input, shape index: {}]
  %s4 = inlined_call_operand.vmem [shape: f32[2,40], index: 4, kind: output, shape index: {}]
  %s5 = sld [smem:[#allocation0]]
  $region38: #{attention_forward.1} parent=0
    _
  %s7 = ssub.s32 1, %s5
  %s8 = scalar_select 0, %s7, %s5
  $region1: #{attention_forward.1} parent=0
    #allocation2 [shape = 'u8[1024]{0}', space=vmem, size = 0x400, scoped, tag = 'input window, operand 0, single buffered']
    #allocation3 [shape = 's32[1]{0}', space=sflag, size = 0x4, scoped, tag = 'scoped memory for attention_forward.1']
    #allocation4 [shape = 'u8[8192]{0}', space=vmem, size = 0x2000, scoped, tag = 'input window, operand 1, single buffered']
    #allocation5 [shape = 's32[1]{0}', space=sflag, size = 0x4, scoped, tag = 'scoped memory for attention_forward.1']
    #allocation6 [shape = 'u8[16384]{0}', space=vmem, size = 0x4000, scoped, tag = 'input window, operand 2, single buffered']
    %9 = vsyncpa [#allocation3], 0
    %10 = vsyncpa [#allocation5], 0
    // Predicated region
    $region2: #{attention_forward.1} parent=1 // pred_check
      _
    $region3: #{attention_forward.1} parent=1 // pred_check_branch
      %12 = sbr.rel (0) target = $region5
    $region4: #{attention_forward.1} parent=1 // pred_region
      %s14 = ssub.s32 32, 32
      %15 = vsyncadd [#allocation3], %s14
      %s17 = sshll.u32 [#allocation2], 4
      %s18 = int_to_ptr.vmem [resolvable:$true] %s17
      %20 = dma.hbm_to_vmem [thread:$0]  %s0, 32, %s18, [#allocation3]
    $region5: #{attention_forward.1} parent=1 // pred_fallthru
      _
    // Predicated region
    $region6: #{attention_forward.1} parent=1 // pred_check
      _
    $region7: #{attention_forward.1} parent=1 // pred_check_branch
      %22 = sbr.rel (0) target = $region9
    $region8: #{attention_forward.1} parent=1 // pred_region
      %s24 = ssub.s32 256, 256
      %25 = vsyncadd [#allocation5], %s24
      %s26 = sshll.u32 [#allocation4], 4
      %s27 = int_to_ptr.vmem [resolvable:$true] %s26
      %32 = dma.hbm_to_vmem [thread:$0]  %s1, 256, %s27, [#allocation5], 128, 128, 8
    $region9: #{attention_forward.1} parent=1 // pred_fallthru
      _
    // Predicated region
    $region10: #{attention_forward.1} parent=1 // pred_check
      _
    $region11: #{attention_forward.1} parent=1 // pred_check_branch
      %34 = sbr.rel (0) target = $region13
    $region12: #{attention_forward.1} parent=1 // pred_region
      %s36 = ssub.s32 512, 512
      %37 = vsyncadd [#allocation5], %s36
      %s38 = sshll.u32 [#allocation6], 4
      %s39 = int_to_ptr.vmem [resolvable:$true] %s38
      %44 = dma.hbm_to_vmem [thread:$0]  %s2, 512, %s39, [#allocation5], 128, 128, 8
    $region13: #{attention_forward.1} parent=1 // pred_fallthru
      _
    // Predicated region
    $region14: #{attention_forward.1} parent=1 // pred_check
      _
    $region15: #{attention_forward.1} parent=1 // pred_check_branch
      %46 = sbr.rel (0) target = $region17
    $region16: #{attention_forward.1} parent=1 // pred_region
      _
    $region17: #{attention_forward.1} parent=1 // pred_fallthru
      _
    // Predicated region
    $region18: #{attention_forward.1} parent=1 // pred_check
      _
    $region19: #{attention_forward.1} parent=1 // pred_check_branch
      %48 = sbr.rel (0) target = $region21
    $region20: #{attention_forward.1} parent=1 // pred_region
      %49 = dma.done [#allocation3], 32
    $region21: #{attention_forward.1} parent=1 // pred_fallthru
      _
    // Predicated region
    $region22: #{attention_forward.1} parent=1 // pred_check
      _
    $region23: #{attention_forward.1} parent=1 // pred_check_branch
      %51 = sbr.rel (0) target = $region25
    $region24: #{attention_forward.1} parent=1 // pred_region
      %52 = dma.done [#allocation5], 256
    $region25: #{attention_forward.1} parent=1 // pred_fallthru
      _
    // Predicated region
    $region26: #{attention_forward.1} parent=1 // pred_check
      _
    $region27: #{attention_forward.1} parent=1 // pred_check_branch
      %54 = sbr.rel (0) target = $region29
    $region28: #{attention_forward.1} parent=1 // pred_region
      %55 = dma.done [#allocation5], 512
    $region29: #{attention_forward.1} parent=1 // pred_fallthru
      _
    %v56 = vld [vmem:[#allocation2] sm:$0x3]
    %v57 = vld [vmem:[#allocation4] sm:$0xff]
    %v58 = vld [vmem:[#allocation4 + $0x8] sm:$0xff]
    %v59 = vld [vmem:[#allocation6] sm:$0xff]
    %v60 = vld [vmem:[#allocation6 + $0x8] sm:$0xff]
    %v61 = vld [vmem:[#allocation6 + $0x10] sm:$0xff]
    %v62 = vld [vmem:[#allocation6 + $0x18] sm:$0xff]
    %vm63 = vcmask 261120
    %v65 = vsel %vm63, %v57, 0
    %v68 = vsel %vm63, %v58, 0
    %v71 = vsel %vm63, %v56, 0
    %73 = vmatprep.subr.mxu0 0.0
    %74 = vmatpush1.msra.mxu0 0.0
    %75 = vmatprep.subr.mxu0 0.0
    %76 = vmatpush1.msra.mxu0 0.0
    %77 = vmatprep.subr.mxu0 0.0
    %78 = vmatpush1.msra.mxu0 0.0
    %79 = vmatprep.subr.mxu0 0.0
    %80 = vmatpush1.msra.mxu0 0.0
    %81 = vmatprep.subr.mxu0 0.0
    %82 = vmatpush1.msra.mxu0 0.0
    %83 = vmatprep.subr.mxu0 0.0
    %84 = vmatpush1.msra.mxu0 0.0
    %85 = vmatprep.subr.mxu0 0.0
    %86 = vmatpush1.msra.mxu0 0.0
    %87 = vmatprep.subr.mxu0 0.0
    %88 = vmatpush1.msra.mxu0 0.0
    %89 = vmatprep.subr.mxu0 0.0
    %90 = vmatpush1.msra.mxu0 0.0
    %91 = vmatprep.subr.mxu0 0.0
    %92 = vmatpush1.msra.mxu0 0.0
    %93 = vmatprep.subr.mxu0 0.0
    %94 = vmatpush1.msra.mxu0 0.0
    %95 = vmatprep.subr.mxu0 0.0
    %96 = vmatpush1.msra.mxu0 0.0
    %97 = vmatprep.subr.mxu0 0.0
    %98 = vmatpush1.msra.mxu0 %v62
    %99 = vmatprep.subr.mxu0 0.0
    %100 = vmatpush1.msra.mxu0 %v61
    %101 = vmatprep.subr.mxu0 0.0
    %102 = vmatpush1.msra.mxu0 %v60
    %103 = vmatprep.subr.mxu0 0.0
    %104 = vmatpush1.msra.mxu0 %v59
    %105 = vmatprep.subr.mxu0 0.0
    %106 = vmatpush2.msra.mxu0 0.0
    %107 = vmatprep.subr.mxu0 0.0
    %108 = vmatpush2.msra.mxu0 0.0
    %109 = vmatprep.subr.mxu0 0.0
    %110 = vmatpush2.msra.mxu0 0.0
    %111 = vmatprep.subr.mxu0 0.0
    %112 = vmatpush2.msra.mxu0 0.0
    %113 = vmatprep.subr.mxu0 0.0
    %114 = vmatpush2.msra.mxu0 0.0
    %115 = vmatprep.subr.mxu0 0.0
    %116 = vmatpush2.msra.mxu0 0.0
    %117 = vmatprep.subr.mxu0 0.0
    %118 = vmatpush2.msra.mxu0 0.0
    %119 = vmatprep.subr.mxu0 0.0
    %120 = vmatpush2.msra.mxu0 0.0
    %121 = vmatprep.subr.mxu0 0.0
    %122 = vmatpush2.msra.mxu0 0.0
    %123 = vmatprep.subr.mxu0 0.0
    %124 = vmatpush2.msra.mxu0 0.0
    %125 = vmatprep.subr.mxu0 0.0
    %126 = vmatpush2.msra.mxu0 0.0
    %127 = vmatprep.subr.mxu0 0.0
    %128 = vmatpush2.msra.mxu0 0.0
    %129 = vmatprep.subr.mxu0 0.0
    %130 = vmatpush2.msra.mxu0 0.0
    %131 = vmatprep.subr.mxu0 0.0
    %132 = vmatpush2.msra.mxu0 0.0
    %133 = vmatprep.subr.mxu0 0.0
    %134 = vmatpush2.msra.mxu0 0.0
    %135 = vmatprep.subr.mxu0 0.0
    %136 = vmatpush2.msra.mxu0 0.0
    %137 = vmatprep.mubr.f32.mxu0 0.0
    %138 = vmatmul.mubr.f32.gmra.mxu0 %v65
    %v139 = vpop.f32.mrf.mxu0
    %v140 = vadd.f32 0.0, %v139
    %v141 = vpop.f32.mrf.mxu0
    %142 = vmatprep.mubr.f32.mxu0 0.0
    %143 = vmatmul.mubr.f32.gmra.mxu0 %v68
    %v144 = vpop.f32.mrf.mxu0
    %v145 = vadd.f32 0.0, %v144
    %v146 = vpop.f32.mrf.mxu0
    %147 = vmatprep.mubr.f32.mxu0 0.0
    %148 = vmatmul.mubr.f32.gmra.mxu0 %v71
    %v149 = vpop.f32.mrf.mxu0
    %v150 = vadd.f32 0.0, %v149
    %v151 = vpop.f32.mrf.mxu0
    %152 = vdwg.mxu0
    %v153 = vld [vmem:[%s3] sm:$0x1]
    %v154 = vld [vmem:[%s3 + $0x1] sm:$0x1]
    %v157 = vunpack.c.l.s4 1966171168
    %v158 = vunpack.c.0.s8 %v157
    %v159 = vlaneseq
    %v160 = vshrl.u32 %v159, 7
    %v161 = vsub.s32 %v158, %v160
    %v162 = vrot.slane %v150, %v161
    %v163 = vcombine.high %v162, %v162
    %v165 = vunpack.c.l.s4 1966171168
    %v166 = vunpack.c.0.s8 %v165
    %v167 = vlaneseq
    %v168 = vshrl.u32 %v167, 7
    %v169 = vsub.s32 %v166, %v168
    %v170 = vrot.slane %v162, %v169
    %v172 = vunpack.c.l.s4 1966171168
    %v173 = vunpack.c.0.s8 %v172
    %v174 = vlaneseq
    %v175 = vshrl.u32 %v174, 7
    %v176 = vsub.s32 %v173, %v175
    %v177 = vrot.slane %v163, %v176
    %v178 = vlaneseq
    %v179 = vshrl.u32 %v178, 7
    %v180 = vsub.s32 0, %v179
    %v181 = vrot.slane %v170, %v180
    %v182 = vlaneseq
    %v183 = vshrl.u32 %v182, 7
    %v184 = vsub.s32 0, %v183
    %v185 = vrot.slane %v177, %v184
    %190 = vrot.lane.b32.xlu0 %v140, 96
    %v191 = vpop.permute.xlu0 %190
    %192 = vrot.lane.b32.xlu0 %v145, 96
    %v193 = vpop.permute.xlu0 %192
    %v196 = vadd.f32 %v181, %v191
    %v197 = vadd.f32 %v185, %v193
    %v198 = vlaneseq
    %v199 = vshrl.u32 %v198, 7
    %v200 = vsub.s32 0, %v199
    %v201 = vrot.slane %v153, %v200
    %v202 = vadd.f32 %v196, %v201
    %v203 = vadd.f32 %v197, %v201
    %v204 = vtanh.pop %v202
    %v205 = vtanh.pop %v203
    %v206 = vlaneseq
    %v207 = vshrl.u32 %v206, 7
    %v208 = vsub.s32 0, %v207
    %v209 = vrot.slane %v154, %v208
    %v210 = vmul.f32 %v204, %v209
    %v211 = vmul.f32 %v205, %v209
    %v212 = vsel %vm63, %v210, 0.0
    %213 = vadd.xlane.f32.xlu0 %v212
    %v214 = vpop.xlane.xlu0 %213
    %v215 = vsel %vm63, %v211, 0.0
    %216 = vadd.xlane.f32.xlu0 %v215
    %v217 = vpop.xlane.xlu0 %216
    %v220 = vlaneseq
    %v221 = vand.u32 %v220, 127
    %v222 = vlaneseq
    %v223 = vshrl.u32 %v222, 7
    %v224 = vsub.s32 %v221, %v223
    %v225 = vrot.slane %v214, %v224
    %v226 = vlaneseq
    %v227 = vshrl.u32 %v226, 7
    %v228 = vsub.s32 %v221, %v227
    %v229 = vrot.slane %v217, %v228
    %vm230 = vcmask 1041409
    %v231 = vsel %vm230, %v229, %v225
    %vm233 = vcmask 58368
    %v234 = vsel %vm233, %v231, -inf
    %235 = vmax.xlane.f32.xlu0 %v234
    %v236 = vpop.xlane.xlu0 %235
    %v238 = vlaneseq
    %v239 = vshrl.u32 %v238, 7
    %v240 = vsub.s32 0, %v239
    %v241 = vrot.slane %v236, %v240
    %v242 = vlaneseq
    %v243 = vshrl.u32 %v242, 7
    %v244 = vsub.s32 1, %v243
    %v245 = vrot.slane %v236, %v244
    %v248 = vsub.f32 %v214, %v241
    %v249 = vsub.f32 %v217, %v245
    %v250 = vmul.f32 %v248, 1.442695
    %v251 = vpow.pop %v250
    %v252 = vmul.f32 %v249, 1.442695
    %v253 = vpow.pop %v252
    %256 = vset.pattern.permute.xlu0 0
    %257 = vperm.xlu0 %256, %v251
    %v258 = vpop.permute.xlu0 %257
    %259 = vset.pattern.permute.xlu0 0
    %260 = vperm.xlu0 %259, %v253
    %v261 = vpop.permute.xlu0 %260
    %v262 = vlaneseq
    %v263 = vshrl.u32 %v262, 7
    %v264 = vsub.s32 %v221, %v263
    %v265 = vrot.slane %v258, %v264
    %v266 = vlaneseq
    %v267 = vshrl.u32 %v266, 7
    %v268 = vsub.s32 %v221, %v267
    %v269 = vrot.slane %v261, %v268
    %v270 = vsel %vm230, %v269, %v265
    %v272 = vsel %vm233, %v270, 0.0
    %273 = vadd.xlane.f32.xlu0 %v272
    %v274 = vpop.xlane.xlu0 %273
    %v276 = vlaneseq
    %v277 = vshrl.u32 %v276, 7
    %v278 = vsub.s32 0, %v277
    %v279 = vrot.slane %v274, %v278
    %v280 = vlaneseq
    %v281 = vshrl.u32 %v280, 7
    %v282 = vsub.s32 1, %v281
    %v283 = vrot.slane %v274, %v282
    %v286 = vrcp.pop %v279
    %v287 = vmul.f32 %v251, %v286
    %v288 = vrcp.pop %v283
    %v289 = vmul.f32 %v253, %v288
    %291 = vset.pattern.permute.xlu0 0
    %292 = vperm.xlu0 %291, %v287
    %v293 = vpop.permute.xlu0 %292
    %296 = vset.pattern.permute.xlu0 0
    %297 = vperm.xlu0 %296, %v289
    %v298 = vpop.permute.xlu0 %297
    %v300 = vmul.f32 %v57, %v293
    %v301 = vmul.f32 %v58, %v298
    %v302 = vsel %vm63, %v300, 0.0
    %v303 = vrot.slane %v302, 4
    %v304 = vadd.f32 %v302, %v303
    %v305 = vrot.slane %v304, 2
    %v306 = vadd.f32 %v304, %v305
    %v307 = vrot.slane %v306, 1
    %v308 = vadd.f32 %v306, %v307
    %v309 = vsel %vm63, %v301, 0.0
    %v310 = vrot.slane %v309, 4
    %v311 = vadd.f32 %v309, %v310
    %v312 = vrot.slane %v311, 2
    %v313 = vadd.f32 %v311, %v312
    %v314 = vrot.slane %v313, 1
    %v315 = vadd.f32 %v313, %v314
    %v318 = vsel %vm230, %v315, %v308
    %vm320 = vcmask 254976
    %321 = vst.msk [vmem:[%s4] sm:$0x3] %vm320, %v318
    %v322 = vadd.s32 %v221, 4294967264
    %v323 = vlaneseq
    %v324 = vshrl.u32 %v323, 7
    %v325 = vsub.s32 %v322, %v324
    %v326 = vrot.slane %v293, %v325
    %v327 = vlaneseq
    %v328 = vshrl.u32 %v327, 7
    %v329 = vsub.s32 %v322, %v328
    %v330 = vrot.slane %v298, %v329
    %v331 = vsel %vm230, %v330, %v326
    %vm333 = vcmask 320768
    %334 = vst.msk [vmem:[%s4] sm:$0x3] %vm333, %v331
    // Predicated region
    $region30: #{attention_forward.1} parent=1 // pred_check
      _
    $region31: #{attention_forward.1} parent=1 // pred_check_branch
      %336 = sbr.rel (0) target = $region33
    $region32: #{attention_forward.1} parent=1 // pred_region
      _
    $region33: #{attention_forward.1} parent=1 // pred_fallthru
      _
    // Predicated region
    $region34: #{attention_forward.1} parent=1 // pred_check
      _
    $region35: #{attention_forward.1} parent=1 // pred_check_branch
      %338 = sbr.rel (0) target = $region37
    $region36: #{attention_forward.1} parent=1 // pred_region
      _
    $region37: #{attention_forward.1} parent=1 // pred_fallthru
      _
    %339 = vsyncpa [#allocation3], 1
    %340 = vsyncpa [#allocation5], 1

</llo_original>
